<compile_context>
chip_gen: v5e
topology: v5e:2x2
jax: 0.10.0
libtpu: 0.0.40
codegen_flags: <defaults>
</compile_context>

<pallas_src>
import functools

import jax
import jax.numpy as jnp
from jax.experimental import pallas as pl
from jax.experimental.pallas import tpu as pltpu

EPS = 1e-12       # F.normalize / SLR weight-normalize eps
_LANE = 128


def _round_up(n, m):
    return ((n + m - 1) // m) * m


def _head_kernel(x_ref, wbn_ref, bbn_ref, wfc_ref, tbias_ref,
                 x_out_ref, y_out_ref, *, radius):
    """One batch tile of: bottleneck -> radius*normalize -> SLR layer."""
    # Cast to bf16 in-kernel (no separate wrapper-side cast pass over x).
    xb = x_ref[...].astype(jnp.bfloat16)                          # (TB, F)

    # ---- bottleneck linear: (TB, F) @ (F, D) + b -------------------------
    b = jnp.dot(xb, wbn_ref[...], preferred_element_type=jnp.float32)
    b = b + bbn_ref[...]                                          # (1, D) bcast

    # ---- x = radius * F.normalize(b, dim=1): one EUP rsqrt ---------------
    sq = jnp.sum(b * b, axis=-1, keepdims=True)                   # (TB, 1)
    xn = b * (radius * jax.lax.rsqrt(jnp.maximum(sq, EPS * EPS)))

    # ---- SLR layer --------------------------------------------------------
    # Every row of xn has norm == radius, so r = ||x[0]|| is a constant that
    # the wrapper folded into tbias (= radius * tanh(b_fc)): no per-tile
    # cross-lane reduce / sqrt here.
    cos = jnp.dot(xn.astype(jnp.bfloat16), wfc_ref[...],
                  preferred_element_type=jnp.float32)             # (TB, Cp)
    y = cos + tbias_ref[...]                                      # (1, Cp)

    x_out_ref[...] = xn.astype(x_out_ref.dtype)
    y_out_ref[...] = y.astype(y_out_ref.dtype)


def prepare_head_params(params, *, radius=8.5):
    """Batch-independent weight preprocessing (run ONCE for static weights)."""
    D, F = params["w_bottleneck"].shape          # (bottleneck_dim, feat)
    C, _ = params["w_fc"].shape                  # (class_num, bottleneck_dim)
    Cp = _round_up(C, _LANE)                     # lane-dense class dimension

    wbn_t = params["w_bottleneck"].T.astype(jnp.bfloat16)             # (F, D)
    b_bn = params["b_bottleneck"].reshape(1, D).astype(jnp.float32)

    wfc = params["w_fc"].astype(jnp.float32)
    wfc_n = wfc * jax.lax.rsqrt(
        jnp.maximum(jnp.sum(wfc * wfc, axis=1, keepdims=True), EPS * EPS))
    wfc_n_t = wfc_n.T.astype(jnp.bfloat16)                            # (D, C)
    tbias = (radius * jnp.tanh(params["b_fc"])).reshape(1, C).astype(jnp.float32)

    if Cp != C:  # zero-pad classes -> unmasked full-lane y stores
        wfc_n_t = jnp.pad(wfc_n_t, ((0, 0), (0, Cp - C)))
        tbias = jnp.pad(tbias, ((0, 0), (0, Cp - C)))

    return {"wbn_t": wbn_t, "b_bn": b_bn, "wfc_n_t": wfc_n_t,
            "tbias": tbias, "radius": float(radius), "class_num": int(C)}


def _choose_batch_tile(B, block_batch):
    # >=2 grid steps when possible (both TCs on v7x), 16-row granularity
    # (bf16 sublane packing of the activation tile).
    tb = _round_up(max(1, -(-B // 2)), 16)
    tb = min(tb, max(16, _round_up(block_batch, 16)))
    return tb


def resnetfc_forward(x_feat, prepped, *, block_batch=256):
    """Pallas forward of the ResNetFc head. Returns (x_, x, y)."""
    B, F = x_feat.shape
    F2, D = prepped["wbn_t"].shape
    _, Cp = prepped["wfc_n_t"].shape
    C = prepped["class_num"]
    radius = prepped["radius"]
    assert F == F2, "feature dim mismatch between x_feat and w_bottleneck"

    tb = _choose_batch_tile(B, block_batch)
    num_tiles = pl.cdiv(B, tb)   # ragged last block masked by Pallas; no pad

    # VMEM budget: double-buffered x / x_out / y_out tiles, resident weights,
    # bias rows, plus in-kernel intermediates; 1.5x headroom, 40 MiB cap
    # (v7x has 64 MiB / TC).
    est = (2 * tb * F * 4                          # x tiles (f32)
           + 2 * (F * D * 2 + D * Cp * 2)          # resident bf16 weights
           + 2 * 2 * (D + Cp) * 4                  # bias rows
           + 2 * tb * D * 4                        # x_out tiles (f32)
           + 2 * tb * Cp * 2                       # y_out tiles (bf16)
           + tb * (F * 2 + 3 * D * 4 + Cp * 4))    # intermediates (xb,b,xn,cos)
    vmem_bytes = int(min(max(est + est // 2, 8 * 1024 * 1024),
                         40 * 1024 * 1024))

    # NOTE: the constant-index weight blocks could additionally use
    # pipeline_mode=pl.Buffered(1) to drop their second VMEM buffer on
    # 64 MiB/TC parts; omitted here to keep the lowering maximally portable.
    grid_spec = pltpu.PrefetchScalarGridSpec(
        num_scalar_prefetch=0,
        grid=(num_tiles,),
        in_specs=[
            pl.BlockSpec((tb, F), lambda i: (i, 0)),    # x tile (pipelined, f32)
            pl.BlockSpec((F, D), lambda i: (0, 0)),     # resident weight
            pl.BlockSpec((1, D), lambda i: (0, 0)),     # resident bias
            pl.BlockSpec((D, Cp), lambda i: (0, 0)),    # resident weight
            pl.BlockSpec((1, Cp), lambda i: (0, 0)),    # resident radius*tanh(b)
        ],
        out_specs=[
            pl.BlockSpec((tb, D), lambda i: (i, 0)),
            pl.BlockSpec((tb, Cp), lambda i: (i, 0)),
        ],
    )

    x_out, y_out = pl.pallas_call(
        functools.partial(_head_kernel, radius=radius),
        out_shape=(
            jax.ShapeDtypeStruct((B, D), jnp.float32),
            jax.ShapeDtypeStruct((B, Cp), jnp.bfloat16),  # halve y write stream
        ),
        grid_spec=grid_spec,
        compiler_params=pltpu.CompilerParams(
            dimension_semantics=("parallel",),
            vmem_limit_bytes=vmem_bytes),
    )(x_feat, prepped["wbn_t"], prepped["b_bn"],
      prepped["wfc_n_t"], prepped["tbias"])

    if Cp != C:
        y_out = y_out[:, :C]
    return x_feat, x_out, y_out


# ----------------------------- parameters ---------------------------------

def make_params(key, in_features, bottleneck_dim, class_num):
    """init_weights: Linear -> kaiming_normal_(weight), zeros(bias);
    SLR_layer: kaiming_normal_(weight), zeros(bias)."""
    k1, k2 = jax.random.split(key)
    std_bn = (2.0 / in_features) ** 0.5
    std_fc = (2.0 / bottleneck_dim) ** 0.5
    return {
        "w_bottleneck": std_bn * jax.random.normal(
            k1, (bottleneck_dim, in_features), jnp.float32),
        "b_bottleneck": jnp.zeros((bottleneck_dim,), jnp.float32),
        "w_fc": std_fc * jax.random.normal(
            k2, (class_num, bottleneck_dim), jnp.float32),
        "b_fc": jnp.zeros((class_num,), jnp.float32),
    }


# ------------------------ pure-JAX reference -------------------------------

def reference_forward(x_feat, params, radius=8.5):
    """PyTorch forward math in plain JAX (bf16 MXU-input casts mirrored)."""
    wbn_t = params["w_bottleneck"].T.astype(jnp.bfloat16)
    b = jnp.dot(x_feat.astype(jnp.bfloat16), wbn_t,
                preferred_element_type=jnp.float32)
    b = b + params["b_bottleneck"][None, :]
    norm = jnp.sqrt(jnp.sum(b * b, axis=-1, keepdims=True))
    x = radius * b / jnp.maximum(norm, EPS)
    r = jnp.sqrt(jnp.sum(x[0] * x[0]))                     # ||x[0]|| (== radius)
    wfc = params["w_fc"]
    wfc_n = wfc / jnp.maximum(
        jnp.sqrt(jnp.sum(wfc * wfc, axis=1, keepdims=True)), EPS)
    cos = jnp.dot(x.astype(jnp.bfloat16), wfc_n.T.astype(jnp.bfloat16),
                  preferred_element_type=jnp.float32)
    y = cos + r * jnp.tanh(params["b_fc"])[None, :]
    return x_feat, x, y


if __name__ == "__main__":
    # Small stand-ins for the real (feat=2048, bottleneck=256, class_num=1000).
    # class_num=100 exercises the lane-dense class padding (100 -> 128), and
    # batch=24 with a 16-row tile exercises 2 parallel grid steps plus the
    # ragged (masked) last block.
    batch, feat_dim, bottleneck_dim, class_num = 24, 512, 256, 100
    radius = 8.5

    key = jax.random.PRNGKey(0)
    kx, kp = jax.random.split(key)
    x_feat = jax.random.normal(kx, (batch, feat_dim), jnp.float32)
    params = make_params(kp, feat_dim, bottleneck_dim, class_num)

    prepped = prepare_head_params(params, radius=radius)   # one-time weight prep

    x_, x, y = resnetfc_forward(x_feat, prepped, block_batch=16)
    x = jax.block_until_ready(x)
    y = jax.block_until_ready(y)

    xr_, xr, yr = reference_forward(x_feat, params, radius=radius)

    assert x_.shape == (batch, feat_dim)
    assert x.shape == (batch, bottleneck_dim)
    assert y.shape == (batch, class_num)
    assert jnp.allclose(x, xr, atol=1e-2, rtol=1e-2)
    assert jnp.allclose(y.astype(jnp.float32), yr, atol=6e-2, rtol=2e-2)
    print("KERNEL_OK")
</pallas_src>

<mosaic_0001>
module attributes {stable_mosaic.version = 11 : i64} {
  func.func @_head_kernel(%arg0: i32, %arg1: memref<16x512xf32, #tpu.memory_space<vmem>>, %arg2: memref<512x256xbf16, #tpu.memory_space<vmem>>, %arg3: memref<1x256xf32, #tpu.memory_space<vmem>>, %arg4: memref<256x128xbf16, #tpu.memory_space<vmem>>, %arg5: memref<1x128xf32, #tpu.memory_space<vmem>>, %arg6: memref<16x256xf32, #tpu.memory_space<vmem>>, %arg7: memref<16x128xbf16, #tpu.memory_space<vmem>>) attributes {dimension_semantics = [#tpu.dimension_semantics<parallel>], iteration_bounds = array<i64: 2>, scalar_prefetch = 0 : i64, scratch_operands = 0 : i64, tpu.core_type = #tpu.core_type<tc>, window_params = [{transform_indices = @transform_0, window_bounds = array<i64: 16, 512>}, {pipeline_mode = #tpu.pipeline_mode<synchronous>, transform_indices = @transform_1, window_bounds = array<i64: 512, 256>}, {pipeline_mode = #tpu.pipeline_mode<synchronous>, transform_indices = @transform_2, window_bounds = array<i64: 1, 256>}, {pipeline_mode = #tpu.pipeline_mode<synchronous>, transform_indices = @transform_3, window_bounds = array<i64: 256, 128>}, {pipeline_mode = #tpu.pipeline_mode<synchronous>, transform_indices = @transform_4, window_bounds = array<i64: 1, 128>}, {transform_indices = @transform_5, window_bounds = array<i64: 16, 256>}, {transform_indices = @transform_6, window_bounds = array<i64: 16, 128>}]} {
    %c0 = arith.constant 0 : index
    %c0_0 = arith.constant 0 : index
    %0 = vector.load %arg1[%c0, %c0_0] : memref<16x512xf32, #tpu.memory_space<vmem>>, vector<16x512xf32>
    %1 = arith.truncf %0 : vector<16x512xf32> to vector<16x512xbf16>
    %c0_1 = arith.constant 0 : index
    %c0_2 = arith.constant 0 : index
    %2 = vector.load %arg2[%c0_1, %c0_2] : memref<512x256xbf16, #tpu.memory_space<vmem>>, vector<512x256xbf16>
    %cst = arith.constant dense<0.000000e+00> : vector<16x256xf32>
    %3 = tpu.matmul %1, %2, %cst {dimension_numbers = #tpu.dot_dimension_numbers<[1], [0], [0], [1], [0, 0, 1, 1], [], []>} : vector<16x512xbf16>, vector<512x256xbf16>, vector<16x256xf32> -> vector<16x256xf32>
    %c0_3 = arith.constant 0 : index
    %c0_4 = arith.constant 0 : index
    %4 = vector.load %arg3[%c0_3, %c0_4] : memref<1x256xf32, #tpu.memory_space<vmem>>, vector<1x256xf32>
    %5 = vector.broadcast %4 : vector<1x256xf32> to vector<16x256xf32>
    %6 = arith.addf %3, %5 : vector<16x256xf32>
    %7 = arith.mulf %6, %6 : vector<16x256xf32>
    %cst_5 = arith.constant dense<0.000000e+00> : vector<16xf32>
    %8 = vector.multi_reduction <add>, %7, %cst_5 [1] : vector<16x256xf32> to vector<16xf32>
    %9 = vector.shape_cast %8 : vector<16xf32> to vector<16x1xf32>
    %cst_6 = arith.constant 1.000000e-24 : f32
    %10 = vector.broadcast %cst_6 : f32 to vector<16x1xf32>
    %11 = arith.maximumf %9, %10 : vector<16x1xf32>
    %12 = math.rsqrt %11 : vector<16x1xf32>
    %cst_7 = arith.constant 8.500000e+00 : f32
    %13 = vector.broadcast %cst_7 : f32 to vector<16x1xf32>
    %14 = arith.mulf %13, %12 : vector<16x1xf32>
    %15 = vector.broadcast %14 : vector<16x1xf32> to vector<16x256xf32>
    %16 = arith.mulf %6, %15 : vector<16x256xf32>
    %17 = arith.truncf %16 : vector<16x256xf32> to vector<16x256xbf16>
    %c0_8 = arith.constant 0 : index
    %c0_9 = arith.constant 0 : index
    %18 = vector.load %arg4[%c0_8, %c0_9] : memref<256x128xbf16, #tpu.memory_space<vmem>>, vector<256x128xbf16>
    %cst_10 = arith.constant dense<0.000000e+00> : vector<16x128xf32>
    %19 = tpu.matmul %17, %18, %cst_10 {dimension_numbers = #tpu.dot_dimension_numbers<[1], [0], [0], [1], [0, 0, 1, 1], [], []>} : vector<16x256xbf16>, vector<256x128xbf16>, vector<16x128xf32> -> vector<16x128xf32>
    %c0_11 = arith.constant 0 : index
    %c0_12 = arith.constant 0 : index
    %20 = vector.load %arg5[%c0_11, %c0_12] : memref<1x128xf32, #tpu.memory_space<vmem>>, vector<1x128xf32>
    %21 = vector.broadcast %20 : vector<1x128xf32> to vector<16x128xf32>
    %22 = arith.addf %19, %21 : vector<16x128xf32>
    %c0_13 = arith.constant 0 : index
    %c0_14 = arith.constant 0 : index
    %23 = vector.load %arg6[%c0_13, %c0_14] : memref<16x256xf32, #tpu.memory_space<vmem>>, vector<16x256xf32>
    tpu.vector_store %arg6[%c0_13, %c0_14], %16 {strides = array<i32>} : memref<16x256xf32, #tpu.memory_space<vmem>>, vector<16x256xf32>,
    %24 = arith.truncf %22 : vector<16x128xf32> to vector<16x128xbf16>
    %c0_15 = arith.constant 0 : index
    %c0_16 = arith.constant 0 : index
    %25 = vector.load %arg7[%c0_15, %c0_16] : memref<16x128xbf16, #tpu.memory_space<vmem>>, vector<16x128xbf16>
    tpu.vector_store %arg7[%c0_15, %c0_16], %24 {strides = array<i32>} : memref<16x128xbf16, #tpu.memory_space<vmem>>, vector<16x128xbf16>,
    return
  }
  func.func @transform_0(%arg0: i32) -> (i32, i32) {
    %c0_i32 = arith.constant 0 : i32
    %c0_i32_0 = arith.constant 0 : i32
    return %arg0, %c0_i32 : i32, i32
  }
  func.func @transform_1(%arg0: i32) -> (i32, i32) {
    %c0_i32 = arith.constant 0 : i32
    %c0_i32_0 = arith.constant 0 : i32
    %c0_i32_1 = arith.constant 0 : i32
    return %c0_i32, %c0_i32_0 : i32, i32
  }
  func.func @transform_2(%arg0: i32) -> (i32, i32) {
    %c0_i32 = arith.constant 0 : i32
    %c0_i32_0 = arith.constant 0 : i32
    %c0_i32_1 = arith.constant 0 : i32
    return %c0_i32, %c0_i32_0 : i32, i32
  }
  func.func @transform_3(%arg0: i32) -> (i32, i32) {
    %c0_i32 = arith.constant 0 : i32
    %c0_i32_0 = arith.constant 0 : i32
    %c0_i32_1 = arith.constant 0 : i32
    return %c0_i32, %c0_i32_0 : i32, i32
  }
  func.func @transform_4(%arg0: i32) -> (i32, i32) {
    %c0_i32 = arith.constant 0 : i32
    %c0_i32_0 = arith.constant 0 : i32
    %c0_i32_1 = arith.constant 0 : i32
    return %c0_i32, %c0_i32_0 : i32, i32
  }
  func.func @transform_5(%arg0: i32) -> (i32, i32) {
    %c0_i32 = arith.constant 0 : i32
    %c0_i32_0 = arith.constant 0 : i32
    return %arg0, %c0_i32 : i32, i32
  }
  func.func @transform_6(%arg0: i32) -> (i32, i32) {
    %c0_i32 = arith.constant 0 : i32
    %c0_i32_0 = arith.constant 0 : i32
    return %arg0, %c0_i32 : i32, i32
  }
}

</mosaic_0001>

<llo_original>
// kernel: tpu_custom_call.1
$region0: #{tpu_custom_call.1}
  #allocation0 [shape = 'u32[]', space=smem, size = 0x4, offset = 0x4, fixed_abs, tag = 'smem constant byte address 0x4 - core index']
  #allocation1 [shape = 'u32[72,128]{1,0:T(1,128)}', space=vmem, size = 0x9000, scoped, tag = 'internal scratch']
  %s0 = inlined_call_operand.hbm [shape: f32[24,512], index: 0, kind: input, shape index: {}]
  %s1 = inlined_call_operand.hbm [shape: bf16[512,256], index: 1, kind: input, shape index: {}]
  %s2 = inlined_call_operand.hbm [shape: f32[1,256], index: 2, kind: input, shape index: {}]
  %s3 = inlined_call_operand.hbm [shape: bf16[256,128], index: 3, kind: input, shape index: {}]
  %s4 = inlined_call_operand.vmem [shape: f32[1,128], index: 4, kind: input, shape index: {}]
  %s5 = inlined_call_operand.hbm [shape: f32[24,256], index: 5, kind: output, shape index: {0}]
  %s6 = inlined_call_operand.hbm [shape: bf16[24,128], index: 6, kind: output, shape index: {1}]
  %7 = xla_tuple %s5, %s6
  %s8 = sld [smem:[#allocation0]]
  $region77: #{tpu_custom_call.1} parent=0
    _
  %s10 = ssub.s32 1, %s8
  %s11 = scalar_select 0, %s10, %s8
  $region1: #{tpu_custom_call.1} parent=0
    #allocation2 [shape = 'u8[65536]{0}', space=vmem, size = 0x10000, scoped, tag = 'input window, operand 0']
    #allocation3 [shape = 's32[2]{0}', space=sflag, size = 0x8, scoped, tag = 'scoped memory for tpu_custom_call.1']
    #allocation4 [shape = 's32[2]{0}', space=sflag, size = 0x8, scoped, tag = 'scoped memory for tpu_custom_call.1']
    #allocation5 [shape = 'u8[262144]{0}', space=vmem, size = 0x40000, scoped, tag = 'input window, operand 1, single buffered']
    #allocation6 [shape = 's32[1]{0}', space=sflag, size = 0x4, scoped, tag = 'scoped memory for tpu_custom_call.1']
    #allocation7 [shape = 'u8[1024]{0}', space=vmem, size = 0x400, scoped, tag = 'input window, operand 2, single buffered']
    #allocation8 [shape = 'u8[65536]{0}', space=vmem, size = 0x10000, scoped, tag = 'input window, operand 3, single buffered']
    #allocation9 [shape = 's32[1]{0}', space=sflag, size = 0x4, scoped, tag = 'scoped memory for tpu_custom_call.1']
    #allocation10 [shape = 'u8[32768]{0}', space=vmem, size = 0x8000, scoped, tag = 'output window, operand 0']
    #allocation11 [shape = 'u8[8192]{0}', space=vmem, size = 0x2000, scoped, tag = 'output window, operand 1']
    #allocation12 [shape = 's32[2]{0}', space=sflag, size = 0x8, scoped, tag = 'scoped memory for tpu_custom_call.1']
    %12 = vsyncpa [#allocation3], 0
    %s13 = scalar_lea.sflag [#allocation3], 1
    %14 = vsyncpa %s13, 0
    %15 = vsyncpa [#allocation6], 0
    %16 = vsyncpa [#allocation9], 0
    %17 = vsyncpa [#allocation4], 0
    %s18 = scalar_lea.sflag [#allocation4], 1
    %19 = vsyncpa %s18, 0
    %20 = vsyncpa [#allocation12], 0
    %s21 = scalar_lea.sflag [#allocation12], 1
    %22 = vsyncpa %s21, 0
    loop: start=0, step=1, limit=4
    $region2: #{tpu_custom_call.1} parent=1 // loop_pre_header
      _
    $region3: #{tpu_custom_call.1} parent=1 // loop_header
      %s24 = sphi 0, %s28
      %p25 = scmp.ge.s32.totalorder %s24, 4
      %s34 = sphi 0, %s36
      %s37 = sphi 0, %s34
      %s38 = sphi 0, %s37
      %s54 = sphi 0, %s38
      %s58 = sphi 0, %s58
      %s60 = sphi 0, %s58
      %s61 = sphi 0, %s60
      %s75 = sphi 0, %s61
      %s79 = sphi 0, %s79
      %s81 = sphi 0, %s79
      %s82 = sphi 0, %s81
      %s96 = sphi 0, %s82
      %s100 = sphi 0, %s100
      %s102 = sphi 0, %s100
      %s103 = sphi 0, %s102
      %s117 = sphi 0, %s103
      %s121 = sphi 0, %s121
      %s123 = sphi 0, %s121
      %s124 = sphi 0, %s123
      %s138 = sphi 0, %s124
      %s144 = sphi 0, %s146
      %s147 = sphi 0, %s144
      %s148 = sphi 0, %s147
      %s164 = sphi 0, %s148
      %s170 = sphi 0, %s172
      %s173 = sphi 0, %s170
      %s174 = sphi 0, %s173
      %s190 = sphi 0, %s174
    $region4: #{tpu_custom_call.1} parent=1 // loop_header_branch
      %27 = sbr.rel (%p25) target = $region8
    $region5: #{tpu_custom_call.1} parent=1 // loop_body
      %s29 = ssub.s32 %s24, 1
      %s30 = ssub.s32 %s24, 2
      %s31 = sadd.s32 %s24, 1
      %s32 = ssub.s32 %s24, %s31
      %p33 = scmp.eq.s32.totalorder %s32, 0
      %s35 = sadd.s32 %s34, 1
      %s36 = scalar_select %p33, %s34, %s35
      %p39 = pneg %p33
      %p40 = scmp.eq.s32.totalorder %s24, 1
      %p41 = por %p39, %p40
      %p42 = scmp.ne.s32.totalorder %s34, %s37
      %p43 = scmp.eq.s32.totalorder %s24, 0
      %p44 = por %p42, %p43
      %p45 = scmp.ne.s32.totalorder %s34, %s37
      %p46 = scmp.eq.s32.totalorder %s29, 1
      %p47 = por %p45, %p46
      %p48 = scmp.ne.s32.totalorder %s37, %s38
      %p49 = scmp.eq.s32.totalorder %s29, 0
      %p50 = por %p48, %p49
      %p51 = scmp.ne.s32.totalorder %s37, %s38
      %p52 = scmp.eq.s32.totalorder %s30, 1
      %p53 = por %p51, %p52
      %p55 = scmp.ne.s32.totalorder %s38, %s54
      %p56 = scmp.eq.s32.totalorder %s30, 0
      %p57 = por %p55, %p56
      %s59 = sadd.s32 %s58, 1
      %p62 = scmp.eq.s32.totalorder %s24, 1
      %p63 = scmp.ne.s32.totalorder %s58, %s60
      %p64 = scmp.eq.s32.totalorder %s24, 0
      %p65 = por %p63, %p64
      %p66 = scmp.ne.s32.totalorder %s58, %s60
      %p67 = scmp.eq.s32.totalorder %s29, 1
      %p68 = por %p66, %p67
      %p69 = scmp.ne.s32.totalorder %s60, %s61
      %p70 = scmp.eq.s32.totalorder %s29, 0
      %p71 = por %p69, %p70
      %p72 = scmp.ne.s32.totalorder %s60, %s61
      %p73 = scmp.eq.s32.totalorder %s30, 1
      %p74 = por %p72, %p73
      %p76 = scmp.ne.s32.totalorder %s61, %s75
      %p77 = scmp.eq.s32.totalorder %s30, 0
      %p78 = por %p76, %p77
      %s80 = sadd.s32 %s79, 1
      %p83 = scmp.eq.s32.totalorder %s24, 1
      %p84 = scmp.ne.s32.totalorder %s79, %s81
      %p85 = scmp.eq.s32.totalorder %s24, 0
      %p86 = por %p84, %p85
      %p87 = scmp.ne.s32.totalorder %s79, %s81
      %p88 = scmp.eq.s32.totalorder %s29, 1
      %p89 = por %p87, %p88
      %p90 = scmp.ne.s32.totalorder %s81, %s82
      %p91 = scmp.eq.s32.totalorder %s29, 0
      %p92 = por %p90, %p91
      %p93 = scmp.ne.s32.totalorder %s81, %s82
      %p94 = scmp.eq.s32.totalorder %s30, 1
      %p95 = por %p93, %p94
      %p97 = scmp.ne.s32.totalorder %s82, %s96
      %p98 = scmp.eq.s32.totalorder %s30, 0
      %p99 = por %p97, %p98
      %s101 = sadd.s32 %s100, 1
      %p104 = scmp.eq.s32.totalorder %s24, 1
      %p105 = scmp.ne.s32.totalorder %s100, %s102
      %p106 = scmp.eq.s32.totalorder %s24, 0
      %p107 = por %p105, %p106
      %p108 = scmp.ne.s32.totalorder %s100, %s102
      %p109 = scmp.eq.s32.totalorder %s29, 1
      %p110 = por %p108, %p109
      %p111 = scmp.ne.s32.totalorder %s102, %s103
      %p112 = scmp.eq.s32.totalorder %s29, 0
      %p113 = por %p111, %p112
      %p114 = scmp.ne.s32.totalorder %s102, %s103
      %p115 = scmp.eq.s32.totalorder %s30, 1
      %p116 = por %p114, %p115
      %p118 = scmp.ne.s32.totalorder %s103, %s117
      %p119 = scmp.eq.s32.totalorder %s30, 0
      %p120 = por %p118, %p119
      %s122 = sadd.s32 %s121, 1
      %p125 = scmp.eq.s32.totalorder %s24, 1
      %p126 = scmp.ne.s32.totalorder %s121, %s123
      %p127 = scmp.eq.s32.totalorder %s24, 0
      %p128 = por %p126, %p127
      %p129 = scmp.ne.s32.totalorder %s121, %s123
      %p130 = scmp.eq.s32.totalorder %s29, 1
      %p131 = por %p129, %p130
      %p132 = scmp.ne.s32.totalorder %s123, %s124
      %p133 = scmp.eq.s32.totalorder %s29, 0
      %p134 = por %p132, %p133
      %p135 = scmp.ne.s32.totalorder %s123, %s124
      %p136 = scmp.eq.s32.totalorder %s30, 1
      %p137 = por %p135, %p136
      %p139 = scmp.ne.s32.totalorder %s124, %s138
      %p140 = scmp.eq.s32.totalorder %s30, 0
      %p141 = por %p139, %p140
      %s142 = ssub.s32 %s24, %s31
      %p143 = scmp.eq.s32.totalorder %s142, 0
      %s145 = sadd.s32 %s144, 1
      %s146 = scalar_select %p143, %s144, %s145
      %p149 = pneg %p143
      %p150 = scmp.eq.s32.totalorder %s24, 1
      %p151 = por %p149, %p150
      %p152 = scmp.ne.s32.totalorder %s144, %s147
      %p153 = scmp.eq.s32.totalorder %s24, 0
      %p154 = por %p152, %p153
      %p155 = scmp.ne.s32.totalorder %s144, %s147
      %p156 = scmp.eq.s32.totalorder %s29, 1
      %p157 = por %p155, %p156
      %p158 = scmp.ne.s32.totalorder %s147, %s148
      %p159 = scmp.eq.s32.totalorder %s29, 0
      %p160 = por %p158, %p159
      %p161 = scmp.ne.s32.totalorder %s147, %s148
      %p162 = scmp.eq.s32.totalorder %s30, 1
      %p163 = por %p161, %p162
      %p165 = scmp.ne.s32.totalorder %s148, %s164
      %p166 = scmp.eq.s32.totalorder %s30, 0
      %p167 = por %p165, %p166
      %s168 = ssub.s32 %s24, %s31
      %p169 = scmp.eq.s32.totalorder %s168, 0
      %s171 = sadd.s32 %s170, 1
      %s172 = scalar_select %p169, %s170, %s171
      %p175 = pneg %p169
      %p176 = scmp.eq.s32.totalorder %s24, 1
      %p177 = por %p175, %p176
      %p178 = scmp.ne.s32.totalorder %s170, %s173
      %p179 = scmp.eq.s32.totalorder %s24, 0
      %p180 = por %p178, %p179
      %p181 = scmp.ne.s32.totalorder %s170, %s173
      %p182 = scmp.eq.s32.totalorder %s29, 1
      %p183 = por %p181, %p182
      %p184 = scmp.ne.s32.totalorder %s173, %s174
      %p185 = scmp.eq.s32.totalorder %s29, 0
      %p186 = por %p184, %p185
      %p187 = scmp.ne.s32.totalorder %s173, %s174
      %p188 = scmp.eq.s32.totalorder %s30, 1
      %p189 = por %p187, %p188
      %p191 = scmp.ne.s32.totalorder %s174, %s190
      %p192 = scmp.eq.s32.totalorder %s30, 0
      %p193 = por %p191, %p192
      %p194 = scmp.le.s32.totalorder 1, %s24
      %p195 = scmp.lt.s32.totalorder %s24, 3
      %p196 = pnand %p194, %p195
      %p197 = pneg %p196
      // Predicated region
      $region9: #{tpu_custom_call.1} parent=5 // pred_check
        _
      $region10: #{tpu_custom_call.1} parent=5 // pred_check_branch
        %199 = sbr.rel (%p196) target = $region12
      $region11: #{tpu_custom_call.1} parent=5 // pred_region
        %s200 = ssub.s32 %s24, 1
        // Predicated region
        $region13: #{tpu_custom_call.1} parent=11 // pred_check
          %p201 = pneg %p71
        $region14: #{tpu_custom_call.1} parent=11 // pred_check_branch
          %203 = sbr.rel (%p201) target = $region16
        $region15: #{tpu_custom_call.1} parent=11 // pred_region
          %205 = vsyncadd [#allocation6], 0
          %s206 = sshll.u32 %s1, 4
          %s207 = int_to_ptr.hbm [resolvable:$true] %s206
          %s208 = sshll.u32 [#allocation5], 4
          %s209 = int_to_ptr.vmem [resolvable:$true] %s208
          %214 = dma.hbm_to_vmem [thread:$0]  %s207, 8192, %s209, [#allocation6], 128, 128, 8
        $region16: #{tpu_custom_call.1} parent=11 // pred_fallthru
          _
        // Predicated region
        $region17: #{tpu_custom_call.1} parent=11 // pred_check
          %p215 = pneg %p92
        $region18: #{tpu_custom_call.1} parent=11 // pred_check_branch
          %217 = sbr.rel (%p215) target = $region20
        $region19: #{tpu_custom_call.1} parent=11 // pred_region
          %219 = vsyncadd [#allocation6], 0
          %s221 = sshll.u32 %s2, 4
          %s222 = int_to_ptr.hbm [resolvable:$true] %s221
          %s223 = sshll.u32 [#allocation7], 4
          %s224 = int_to_ptr.vmem [resolvable:$true] %s223
          %226 = dma.hbm_to_vmem [thread:$0]  %s222, 32, %s224, [#allocation6]
        $region20: #{tpu_custom_call.1} parent=11 // pred_fallthru
          _
        // Predicated region
        $region21: #{tpu_custom_call.1} parent=11 // pred_check
          %p227 = pneg %p113
        $region22: #{tpu_custom_call.1} parent=11 // pred_check_branch
          %229 = sbr.rel (%p227) target = $region24
        $region23: #{tpu_custom_call.1} parent=11 // pred_region
          %231 = vsyncadd [#allocation9], 0
          %s232 = sshll.u32 %s3, 4
          %s233 = int_to_ptr.hbm [resolvable:$true] %s232
          %s234 = sshll.u32 [#allocation8], 4
          %s235 = int_to_ptr.vmem [resolvable:$true] %s234
          %240 = dma.hbm_to_vmem [thread:$0]  %s233, 2048, %s235, [#allocation9], 64, 64, 4
        $region24: #{tpu_custom_call.1} parent=11 // pred_fallthru
          _
        // Predicated region
        $region25: #{tpu_custom_call.1} parent=11 // pred_check
          %p241 = pneg %p134
        $region26: #{tpu_custom_call.1} parent=11 // pred_check_branch
          %243 = sbr.rel (%p241) target = $region28
        $region27: #{tpu_custom_call.1} parent=11 // pred_region
          _
        $region28: #{tpu_custom_call.1} parent=11 // pred_fallthru
          _
      $region12: #{tpu_custom_call.1} parent=5 // pred_fallthru
        _
      %p244 = scmp.lt.s32.totalorder %s24, 2
      // Predicated region
      $region29: #{tpu_custom_call.1} parent=5 // pred_check
        %p245 = pneg %p244
      $region30: #{tpu_custom_call.1} parent=5 // pred_check_branch
        %247 = sbr.rel (%p245) target = $region32
      $region31: #{tpu_custom_call.1} parent=5 // pred_region
        // Predicated region
        $region33: #{tpu_custom_call.1} parent=31 // pred_check
          %p248 = pneg %p44
        $region34: #{tpu_custom_call.1} parent=31 // pred_check_branch
          %250 = sbr.rel (%p248) target = $region36
        $region35: #{tpu_custom_call.1} parent=31 // pred_region
          %s251 = sand.u32 %s34, 1
          %s252 = scalar_lea.sflag [#allocation3], %s251
          %s253 = sand.u32 %s34, 1
          %s254 = smul.addr %s253, 64
          %s255 = scalar_lea.vmem [#allocation2], %s254
          %s256 = smul.u32 2, %s24
          %s257 = ssub.s32 3, %s256
          %p258 = scmp.lt.s32.totalorder %s257, 2
          %s259 = scalar_select %p258, %s257, 2
          %s260 = smul.u32 8, %s259
          %s261 = smul.u32 %s260, 4
          %s262 = ssub.s32 64, %s261
          %s263 = sshll.u32 %s262, 4
          %264 = vsyncadd %s252, %s263
          %p265 = scmp.ne.s32.totalorder 0, %s261
          %s266 = smul.addr %s256, 4
          %s267 = smul.addr %s266, 8
          %s268 = scalar_lea.hbm %s0, %s267
          %s269 = smul.u32 32, %s259
          %s270 = sshll.u32 %s268, 4
          %s271 = int_to_ptr.hbm [resolvable:$true] %s270
          %s272 = sshll.u32 %s255, 4
          %s273 = int_to_ptr.vmem [resolvable:$true] %s272
          %s274 = sshll.u32 %s269, 4
          %278 = dma.hbm_to_vmem [thread:$0]  (%p265), %s271, %s274, %s273, %s252, 512, 512, 32
        $region36: #{tpu_custom_call.1} parent=31 // pred_fallthru
          _
      $region32: #{tpu_custom_call.1} parent=5 // pred_fallthru
        _
      %p279 = scmp.le.s32.totalorder 1, %s24
      %p280 = scmp.lt.s32.totalorder %s24, 3
      %p281 = pnand %p279, %p280
      %p282 = pneg %p281
      // Predicated region
      $region37: #{tpu_custom_call.1} parent=5 // pred_check
        _
      $region38: #{tpu_custom_call.1} parent=5 // pred_check_branch
        %284 = sbr.rel (%p281) target = $region40
      $region39: #{tpu_custom_call.1} parent=5 // pred_region
        %s285 = ssub.s32 %s24, 1
        %s286 = sand.u32 %s37, 1
        %s287 = scalar_lea.sflag [#allocation3], %s286
        %s288 = sand.u32 %s37, 1
        %s289 = smul.addr %s288, 64
        %s290 = scalar_lea.vmem [#allocation2], %s289
        // Predicated region
        $region41: #{tpu_custom_call.1} parent=39 // pred_check
          %p291 = pneg %p50
        $region42: #{tpu_custom_call.1} parent=39 // pred_check_branch
          %293 = sbr.rel (%p291) target = $region44
        $region43: #{tpu_custom_call.1} parent=39 // pred_region
          %295 = dma.done %s287, 1024
        $region44: #{tpu_custom_call.1} parent=39 // pred_fallthru
          _
        // Predicated region
        $region45: #{tpu_custom_call.1} parent=39 // pred_check
          %p296 = pneg %p71
        $region46: #{tpu_custom_call.1} parent=39 // pred_check_branch
          %298 = sbr.rel (%p296) target = $region48
        $region47: #{tpu_custom_call.1} parent=39 // pred_region
          %300 = dma.done [#allocation6], 8192
        $region48: #{tpu_custom_call.1} parent=39 // pred_fallthru
          _
        // Predicated region
        $region49: #{tpu_custom_call.1} parent=39 // pred_check
          %p301 = pneg %p92
        $region50: #{tpu_custom_call.1} parent=39 // pred_check_branch
          %303 = sbr.rel (%p301) target = $region52
        $region51: #{tpu_custom_call.1} parent=39 // pred_region
          %305 = dma.done [#allocation6], 32
        $region52: #{tpu_custom_call.1} parent=39 // pred_fallthru
          _
        // Predicated region
        $region53: #{tpu_custom_call.1} parent=39 // pred_check
          %p306 = pneg %p113
        $region54: #{tpu_custom_call.1} parent=39 // pred_check_branch
          %308 = sbr.rel (%p306) target = $region56
        $region55: #{tpu_custom_call.1} parent=39 // pred_region
          %310 = dma.done [#allocation9], 2048
        $region56: #{tpu_custom_call.1} parent=39 // pred_fallthru
          _
        %s311 = sand.u32 %s37, 1
        %s312 = scalar_lea.sflag [#allocation3], %s311
        %s313 = sand.u32 %s37, 1
        %s314 = smul.addr %s313, 64
        %s315 = scalar_lea.vmem [#allocation2], %s314
        %p316 = pneg %p50
        %p317 = pneg %p47
        %p318 = pneg %p71
        %p319 = pneg %p68
        %p320 = pneg %p92
        %p321 = pneg %p89
        %p322 = pneg %p113
        %p323 = pneg %p110
        %p324 = pneg %p134
        %p325 = pneg %p131
        %p326 = pneg %p160
        %p327 = pneg %p157
        %s328 = sand.u32 %s147, 1
        %s329 = scalar_lea.sflag [#allocation4], %s328
        %s330 = sand.u32 %s147, 1
        %s331 = smul.addr %s330, 32
        %s332 = scalar_lea.vmem [#allocation10], %s331
        %p333 = pneg %p186
        %p334 = pneg %p183
        %s335 = sand.u32 %s173, 1
        %s336 = scalar_lea.sflag [#allocation12], %s335
        %s337 = sand.u32 %s173, 1
        %s338 = smul.addr %s337, 8
        %s339 = scalar_lea.vmem [#allocation11], %s338
        %s340 = smul.u32 2, %s29
        %s341 = ssub.s32 3, %s340
        %p342 = scmp.lt.s32.totalorder %s341, 2
        %s343 = scalar_select %p342, %s341, 2
        %s344 = smul.u32 8, %s343
        %s345 = smul.u32 %s344, 4
        %s346 = smul.u32 2, %s29
        %s347 = ssub.s32 3, %s346
        %p348 = scmp.lt.s32.totalorder %s347, 2
        %s349 = scalar_select %p348, %s347, 2
        %s350 = smul.u32 8, %s349
        %s351 = smul.u32 %s350, 2
        %s352 = smul.u32 2, %s29
        %s353 = ssub.s32 3, %s352
        %p354 = scmp.lt.s32.totalorder %s353, 2
        %s355 = scalar_select %p354, %s353, 2
        %s356 = smul.u32 4, %s355
        %v357 = vld [vmem:[%s290] sm:$0xff]
        %v358 = vld [vmem:[%s290 + $0x8] sm:$0xff]
        %v359 = vld [vmem:[%s290 + $0x10] sm:$0xff]
        %v360 = vld [vmem:[%s290 + $0x18] sm:$0xff]
        %v361 = vld [vmem:[%s290 + $0x20] sm:$0xff]
        %v362 = vld [vmem:[%s290 + $0x28] sm:$0xff]
        %v363 = vld [vmem:[%s290 + $0x30] sm:$0xff]
        %v364 = vld [vmem:[%s290 + $0x38] sm:$0xff]
        %v365 = vpack.c.bf16 %v361, %v357
        %v366 = vpack.c.bf16 %v362, %v358
        %v367 = vpack.c.bf16 %v363, %v359
        %v368 = vpack.c.bf16 %v364, %v360
        %v369 = vld [vmem:[#allocation5] sm:$0xff]
        %v370 = vld [vmem:[#allocation5 + $0x8] sm:$0xff]
        %v371 = vld [vmem:[#allocation5 + $0x10] sm:$0xff]
        %v372 = vld [vmem:[#allocation5 + $0x18] sm:$0xff]
        %v373 = vld [vmem:[#allocation5 + $0x20] sm:$0xff]
        %v374 = vld [vmem:[#allocation5 + $0x28] sm:$0xff]
        %v375 = vld [vmem:[#allocation5 + $0x30] sm:$0xff]
        %v376 = vld [vmem:[#allocation5 + $0x38] sm:$0xff]
        %v377 = vld [vmem:[#allocation5 + $0x40] sm:$0xff]
        %v378 = vld [vmem:[#allocation5 + $0x48] sm:$0xff]
        %v379 = vld [vmem:[#allocation5 + $0x50] sm:$0xff]
        %v380 = vld [vmem:[#allocation5 + $0x58] sm:$0xff]
        %v381 = vld [vmem:[#allocation5 + $0x60] sm:$0xff]
        %v382 = vld [vmem:[#allocation5 + $0x68] sm:$0xff]
        %v383 = vld [vmem:[#allocation5 + $0x70] sm:$0xff]
        %v384 = vld [vmem:[#allocation5 + $0x78] sm:$0xff]
        %v385 = vld [vmem:[#allocation5 + $0x80] sm:$0xff]
        %v386 = vld [vmem:[#allocation5 + $0x88] sm:$0xff]
        %v387 = vld [vmem:[#allocation5 + $0x90] sm:$0xff]
        %v388 = vld [vmem:[#allocation5 + $0x98] sm:$0xff]
        %v389 = vld [vmem:[#allocation5 + $0xa0] sm:$0xff]
        %v390 = vld [vmem:[#allocation5 + $0xa8] sm:$0xff]
        %v391 = vld [vmem:[#allocation5 + $0xb0] sm:$0xff]
        %v392 = vld [vmem:[#allocation5 + $0xb8] sm:$0xff]
        %v393 = vld [vmem:[#allocation5 + $0xc0] sm:$0xff]
        %v394 = vld [vmem:[#allocation5 + $0xc8] sm:$0xff]
        %v395 = vld [vmem:[#allocation5 + $0xd0] sm:$0xff]
        %v396 = vld [vmem:[#allocation5 + $0xd8] sm:$0xff]
        %v397 = vld [vmem:[#allocation5 + $0xe0] sm:$0xff]
        %v398 = vld [vmem:[#allocation5 + $0xe8] sm:$0xff]
        %v399 = vld [vmem:[#allocation5 + $0xf0] sm:$0xff]
        %v400 = vld [vmem:[#allocation5 + $0xf8] sm:$0xff]
        %v401 = vld [vmem:[#allocation5 + $0x100] sm:$0xff]
        %v402 = vld [vmem:[#allocation5 + $0x108] sm:$0xff]
        %v403 = vld [vmem:[#allocation5 + $0x110] sm:$0xff]
        %v404 = vld [vmem:[#allocation5 + $0x118] sm:$0xff]
        %v405 = vld [vmem:[#allocation5 + $0x120] sm:$0xff]
        %v406 = vld [vmem:[#allocation5 + $0x128] sm:$0xff]
        %v407 = vld [vmem:[#allocation5 + $0x130] sm:$0xff]
        %v408 = vld [vmem:[#allocation5 + $0x138] sm:$0xff]
        %v409 = vld [vmem:[#allocation5 + $0x140] sm:$0xff]
        %v410 = vld [vmem:[#allocation5 + $0x148] sm:$0xff]
        %v411 = vld [vmem:[#allocation5 + $0x150] sm:$0xff]
        %v412 = vld [vmem:[#allocation5 + $0x158] sm:$0xff]
        %v413 = vld [vmem:[#allocation5 + $0x160] sm:$0xff]
        %v414 = vld [vmem:[#allocation5 + $0x168] sm:$0xff]
        %v415 = vld [vmem:[#allocation5 + $0x170] sm:$0xff]
        %v416 = vld [vmem:[#allocation5 + $0x178] sm:$0xff]
        %v417 = vld [vmem:[#allocation5 + $0x180] sm:$0xff]
        %v418 = vld [vmem:[#allocation5 + $0x188] sm:$0xff]
        %v419 = vld [vmem:[#allocation5 + $0x190] sm:$0xff]
        %v420 = vld [vmem:[#allocation5 + $0x198] sm:$0xff]
        %v421 = vld [vmem:[#allocation5 + $0x1a0] sm:$0xff]
        %v422 = vld [vmem:[#allocation5 + $0x1a8] sm:$0xff]
        %v423 = vld [vmem:[#allocation5 + $0x1b0] sm:$0xff]
        %v424 = vld [vmem:[#allocation5 + $0x1b8] sm:$0xff]
        %v425 = vld [vmem:[#allocation5 + $0x1c0] sm:$0xff]
        %v426 = vld [vmem:[#allocation5 + $0x1c8] sm:$0xff]
        %v427 = vld [vmem:[#allocation5 + $0x1d0] sm:$0xff]
        %v428 = vld [vmem:[#allocation5 + $0x1d8] sm:$0xff]
        %v429 = vld [vmem:[#allocation5 + $0x1e0] sm:$0xff]
        %v430 = vld [vmem:[#allocation5 + $0x1e8] sm:$0xff]
        %v431 = vld [vmem:[#allocation5 + $0x1f0] sm:$0xff]
        %v432 = vld [vmem:[#allocation5 + $0x1f8] sm:$0xff]
        %v433 = vld [vmem:[#allocation7] sm:$0x3]
        %v435 = vperm.slane %v433, 0
        %v436 = vperm.slane %v433, 1
        %v503 = vunpack.c.l.b16 %v369
        %v504 = vunpack.c.h.b16 %v369
        %v505 = vunpack.c.l.b16 %v370
        %v506 = vunpack.c.h.b16 %v370
        %v507 = vunpack.c.l.b16 %v371
        %v508 = vunpack.c.h.b16 %v371
        %v509 = vunpack.c.l.b16 %v372
        %v510 = vunpack.c.h.b16 %v372
        %v511 = vunpack.c.l.b16 %v373
        %v512 = vunpack.c.h.b16 %v373
        %v513 = vunpack.c.l.b16 %v374
        %v514 = vunpack.c.h.b16 %v374
        %v515 = vunpack.c.l.b16 %v375
        %v516 = vunpack.c.h.b16 %v375
        %v517 = vunpack.c.l.b16 %v376
        %v518 = vunpack.c.h.b16 %v376
        %v519 = vunpack.c.l.b16 %v377
        %v520 = vunpack.c.h.b16 %v377
        %v521 = vunpack.c.l.b16 %v378
        %v522 = vunpack.c.h.b16 %v378
        %v523 = vunpack.c.l.b16 %v379
        %v524 = vunpack.c.h.b16 %v379
        %v525 = vunpack.c.l.b16 %v380
        %v526 = vunpack.c.h.b16 %v380
        %v527 = vunpack.c.l.b16 %v381
        %v528 = vunpack.c.h.b16 %v381
        %v529 = vunpack.c.l.b16 %v382
        %v530 = vunpack.c.h.b16 %v382
        %v531 = vunpack.c.l.b16 %v383
        %v532 = vunpack.c.h.b16 %v383
        %v533 = vunpack.c.l.b16 %v384
        %v534 = vunpack.c.h.b16 %v384
        %v535 = vunpack.c.l.b16 %v385
        %v536 = vunpack.c.h.b16 %v385
        %v537 = vunpack.c.l.b16 %v386
        %v538 = vunpack.c.h.b16 %v386
        %v539 = vunpack.c.l.b16 %v387
        %v540 = vunpack.c.h.b16 %v387
        %v541 = vunpack.c.l.b16 %v388
        %v542 = vunpack.c.h.b16 %v388
        %v543 = vunpack.c.l.b16 %v389
        %v544 = vunpack.c.h.b16 %v389
        %v545 = vunpack.c.l.b16 %v390
        %v546 = vunpack.c.h.b16 %v390
        %v547 = vunpack.c.l.b16 %v391
        %v548 = vunpack.c.h.b16 %v391
        %v549 = vunpack.c.l.b16 %v392
        %v550 = vunpack.c.h.b16 %v392
        %v551 = vunpack.c.l.b16 %v393
        %v552 = vunpack.c.h.b16 %v393
        %v553 = vunpack.c.l.b16 %v394
        %v554 = vunpack.c.h.b16 %v394
        %v555 = vunpack.c.l.b16 %v395
        %v556 = vunpack.c.h.b16 %v395
        %v557 = vunpack.c.l.b16 %v396
        %v558 = vunpack.c.h.b16 %v396
        %v559 = vunpack.c.l.b16 %v397
        %v560 = vunpack.c.h.b16 %v397
        %v561 = vunpack.c.l.b16 %v398
        %v562 = vunpack.c.h.b16 %v398
        %v563 = vunpack.c.l.b16 %v399
        %v564 = vunpack.c.h.b16 %v399
        %v565 = vunpack.c.l.b16 %v400
        %v566 = vunpack.c.h.b16 %v400
        %v567 = vunpack.c.l.b16 %v401
        %v568 = vunpack.c.h.b16 %v401
        %v569 = vunpack.c.l.b16 %v402
        %v570 = vunpack.c.h.b16 %v402
        %v571 = vunpack.c.l.b16 %v403
        %v572 = vunpack.c.h.b16 %v403
        %v573 = vunpack.c.l.b16 %v404
        %v574 = vunpack.c.h.b16 %v404
        %v575 = vunpack.c.l.b16 %v405
        %v576 = vunpack.c.h.b16 %v405
        %v577 = vunpack.c.l.b16 %v406
        %v578 = vunpack.c.h.b16 %v406
        %v579 = vunpack.c.l.b16 %v407
        %v580 = vunpack.c.h.b16 %v407
        %v581 = vunpack.c.l.b16 %v408
        %v582 = vunpack.c.h.b16 %v408
        %v583 = vunpack.c.l.b16 %v409
        %v584 = vunpack.c.h.b16 %v409
        %v585 = vunpack.c.l.b16 %v410
        %v586 = vunpack.c.h.b16 %v410
        %v587 = vunpack.c.l.b16 %v411
        %v588 = vunpack.c.h.b16 %v411
        %v589 = vunpack.c.l.b16 %v412
        %v590 = vunpack.c.h.b16 %v412
        %v591 = vunpack.c.l.b16 %v413
        %v592 = vunpack.c.h.b16 %v413
        %v593 = vunpack.c.l.b16 %v414
        %v594 = vunpack.c.h.b16 %v414
        %v595 = vunpack.c.l.b16 %v415
        %v596 = vunpack.c.h.b16 %v415
        %v597 = vunpack.c.l.b16 %v416
        %v598 = vunpack.c.h.b16 %v416
        %v599 = vunpack.c.l.b16 %v417
        %v600 = vunpack.c.h.b16 %v417
        %v601 = vunpack.c.l.b16 %v418
        %v602 = vunpack.c.h.b16 %v418
        %v603 = vunpack.c.l.b16 %v419
        %v604 = vunpack.c.h.b16 %v419
        %v605 = vunpack.c.l.b16 %v420
        %v606 = vunpack.c.h.b16 %v420
        %v607 = vunpack.c.l.b16 %v421
        %v608 = vunpack.c.h.b16 %v421
        %v609 = vunpack.c.l.b16 %v422
        %v610 = vunpack.c.h.b16 %v422
        %v611 = vunpack.c.l.b16 %v423
        %v612 = vunpack.c.h.b16 %v423
        %v613 = vunpack.c.l.b16 %v424
        %v614 = vunpack.c.h.b16 %v424
        %v615 = vunpack.c.l.b16 %v425
        %v616 = vunpack.c.h.b16 %v425
        %v617 = vunpack.c.l.b16 %v426
        %v618 = vunpack.c.h.b16 %v426
        %v619 = vunpack.c.l.b16 %v427
        %v620 = vunpack.c.h.b16 %v427
        %v621 = vunpack.c.l.b16 %v428
        %v622 = vunpack.c.h.b16 %v428
        %v623 = vunpack.c.l.b16 %v429
        %v624 = vunpack.c.h.b16 %v429
        %v625 = vunpack.c.l.b16 %v430
        %v626 = vunpack.c.h.b16 %v430
        %v627 = vunpack.c.l.b16 %v431
        %v628 = vunpack.c.h.b16 %v431
        %v629 = vunpack.c.l.b16 %v432
        %v630 = vunpack.c.h.b16 %v432
        %v631 = vpack.c.b16 %v505, %v503
        %v632 = vpack.c.b16 %v506, %v504
        %v633 = vpack.c.b16 %v509, %v507
        %v634 = vpack.c.b16 %v510, %v508
        %v635 = vpack.c.b16 %v513, %v511
        %v636 = vpack.c.b16 %v514, %v512
        %v637 = vpack.c.b16 %v517, %v515
        %v638 = vpack.c.b16 %v518, %v516
        %v639 = vpack.c.b16 %v521, %v519
        %v640 = vpack.c.b16 %v522, %v520
        %v641 = vpack.c.b16 %v525, %v523
        %v642 = vpack.c.b16 %v526, %v524
        %v643 = vpack.c.b16 %v529, %v527
        %v644 = vpack.c.b16 %v530, %v528
        %v645 = vpack.c.b16 %v533, %v531
        %v646 = vpack.c.b16 %v534, %v532
        %v647 = vpack.c.b16 %v537, %v535
        %v648 = vpack.c.b16 %v538, %v536
        %v649 = vpack.c.b16 %v541, %v539
        %v650 = vpack.c.b16 %v542, %v540
        %v651 = vpack.c.b16 %v545, %v543
        %v652 = vpack.c.b16 %v546, %v544
        %v653 = vpack.c.b16 %v549, %v547
        %v654 = vpack.c.b16 %v550, %v548
        %v655 = vpack.c.b16 %v553, %v551
        %v656 = vpack.c.b16 %v554, %v552
        %v657 = vpack.c.b16 %v557, %v555
        %v658 = vpack.c.b16 %v558, %v556
        %v659 = vpack.c.b16 %v561, %v559
        %v660 = vpack.c.b16 %v562, %v560
        %v661 = vpack.c.b16 %v565, %v563
        %v662 = vpack.c.b16 %v566, %v564
        %v663 = vpack.c.b16 %v569, %v567
        %v664 = vpack.c.b16 %v570, %v568
        %v665 = vpack.c.b16 %v573, %v571
        %v666 = vpack.c.b16 %v574, %v572
        %v667 = vpack.c.b16 %v577, %v575
        %v668 = vpack.c.b16 %v578, %v576
        %v669 = vpack.c.b16 %v581, %v579
        %v670 = vpack.c.b16 %v582, %v580
        %v671 = vpack.c.b16 %v585, %v583
        %v672 = vpack.c.b16 %v586, %v584
        %v673 = vpack.c.b16 %v589, %v587
        %v674 = vpack.c.b16 %v590, %v588
        %v675 = vpack.c.b16 %v593, %v591
        %v676 = vpack.c.b16 %v594, %v592
        %v677 = vpack.c.b16 %v597, %v595
        %v678 = vpack.c.b16 %v598, %v596
        %v679 = vpack.c.b16 %v601, %v599
        %v680 = vpack.c.b16 %v602, %v600
        %v681 = vpack.c.b16 %v605, %v603
        %v682 = vpack.c.b16 %v606, %v604
        %v683 = vpack.c.b16 %v609, %v607
        %v684 = vpack.c.b16 %v610, %v608
        %v685 = vpack.c.b16 %v613, %v611
        %v686 = vpack.c.b16 %v614, %v612
        %v687 = vpack.c.b16 %v617, %v615
        %v688 = vpack.c.b16 %v618, %v616
        %v689 = vpack.c.b16 %v621, %v619
        %v690 = vpack.c.b16 %v622, %v620
        %v691 = vpack.c.b16 %v625, %v623
        %v692 = vpack.c.b16 %v626, %v624
        %v693 = vpack.c.b16 %v629, %v627
        %v694 = vpack.c.b16 %v630, %v628
        %759 = vmatpush.bf16.msra.mxu0 %v645
        %760 = vmatpush.bf16.msra.mxu0 %v643
        %761 = vmatpush.bf16.msra.mxu0 %v641
        %762 = vmatpush.bf16.msra.mxu0 %v639
        %763 = vmatpush.bf16.msra.mxu0 %v637
        %764 = vmatpush.bf16.msra.mxu0 %v635
        %765 = vmatpush.bf16.msra.mxu0 %v633
        %766 = vmatpush.bf16.msra.mxu0 %v631
        %767 = vmatmul.bf16.gmra.mxu0 %v365
        %v768 = vpop.f32.mrf.mxu0
        %v769 = vadd.f32 %v435, %v768
        %v770 = vpop.f32.mrf.mxu0
        %v771 = vadd.f32 %v435, %v770
        %772 = vdwg.mxu0
        %773 = vmatpush.bf16.msra.mxu0 %v661
        %774 = vmatpush.bf16.msra.mxu0 %v659
        %775 = vmatpush.bf16.msra.mxu0 %v657
        %776 = vmatpush.bf16.msra.mxu0 %v655
        %777 = vmatpush.bf16.msra.mxu0 %v653
        %778 = vmatpush.bf16.msra.mxu0 %v651
        %779 = vmatpush.bf16.msra.mxu0 %v649
        %780 = vmatpush.bf16.msra.mxu0 %v647
        %781 = vmatmul.bf16.gmra.mxu0 %v366
        %v782 = vpop.f32.mrf.mxu0
        %v783 = vadd.f32 %v769, %v782
        %v784 = vpop.f32.mrf.mxu0
        %v785 = vadd.f32 %v771, %v784
        %786 = vdwg.mxu0
        %787 = vmatpush.bf16.msra.mxu0 %v677
        %788 = vmatpush.bf16.msra.mxu0 %v675
        %789 = vmatpush.bf16.msra.mxu0 %v673
        %790 = vmatpush.bf16.msra.mxu0 %v671
        %791 = vmatpush.bf16.msra.mxu0 %v669
        %792 = vmatpush.bf16.msra.mxu0 %v667
        %793 = vmatpush.bf16.msra.mxu0 %v665
        %794 = vmatpush.bf16.msra.mxu0 %v663
        %795 = vmatmul.bf16.gmra.mxu0 %v367
        %v796 = vpop.f32.mrf.mxu0
        %v797 = vadd.f32 %v783, %v796
        %v798 = vpop.f32.mrf.mxu0
        %v799 = vadd.f32 %v785, %v798
        %800 = vdwg.mxu0
        %801 = vmatpush.bf16.msra.mxu0 %v693
        %802 = vmatpush.bf16.msra.mxu0 %v691
        %803 = vmatpush.bf16.msra.mxu0 %v689
        %804 = vmatpush.bf16.msra.mxu0 %v687
        %805 = vmatpush.bf16.msra.mxu0 %v685
        %806 = vmatpush.bf16.msra.mxu0 %v683
        %807 = vmatpush.bf16.msra.mxu0 %v681
        %808 = vmatpush.bf16.msra.mxu0 %v679
        %809 = vmatmul.bf16.gmra.mxu0 %v368
        %v810 = vpop.f32.mrf.mxu0
        %v811 = vadd.f32 %v797, %v810
        %v812 = vpop.f32.mrf.mxu0
        %v813 = vadd.f32 %v799, %v812
        %814 = vdwg.mxu0
        %815 = vmatpush.bf16.msra.mxu0 %v646
        %816 = vmatpush.bf16.msra.mxu0 %v644
        %817 = vmatpush.bf16.msra.mxu0 %v642
        %818 = vmatpush.bf16.msra.mxu0 %v640
        %819 = vmatpush.bf16.msra.mxu0 %v638
        %820 = vmatpush.bf16.msra.mxu0 %v636
        %821 = vmatpush.bf16.msra.mxu0 %v634
        %822 = vmatpush.bf16.msra.mxu0 %v632
        %823 = vmatmul.bf16.gmra.mxu0 %v365
        %v824 = vpop.f32.mrf.mxu0
        %v825 = vadd.f32 %v436, %v824
        %v826 = vpop.f32.mrf.mxu0
        %v827 = vadd.f32 %v436, %v826
        %828 = vdwg.mxu0
        %829 = vmatpush.bf16.msra.mxu0 %v662
        %830 = vmatpush.bf16.msra.mxu0 %v660
        %831 = vmatpush.bf16.msra.mxu0 %v658
        %832 = vmatpush.bf16.msra.mxu0 %v656
        %833 = vmatpush.bf16.msra.mxu0 %v654
        %834 = vmatpush.bf16.msra.mxu0 %v652
        %835 = vmatpush.bf16.msra.mxu0 %v650
        %836 = vmatpush.bf16.msra.mxu0 %v648
        %837 = vmatmul.bf16.gmra.mxu0 %v366
        %v838 = vpop.f32.mrf.mxu0
        %v839 = vadd.f32 %v825, %v838
        %v840 = vpop.f32.mrf.mxu0
        %v841 = vadd.f32 %v827, %v840
        %842 = vdwg.mxu0
        %843 = vmatpush.bf16.msra.mxu0 %v678
        %844 = vmatpush.bf16.msra.mxu0 %v676
        %845 = vmatpush.bf16.msra.mxu0 %v674
        %846 = vmatpush.bf16.msra.mxu0 %v672
        %847 = vmatpush.bf16.msra.mxu0 %v670
        %848 = vmatpush.bf16.msra.mxu0 %v668
        %849 = vmatpush.bf16.msra.mxu0 %v666
        %850 = vmatpush.bf16.msra.mxu0 %v664
        %851 = vmatmul.bf16.gmra.mxu0 %v367
        %v852 = vpop.f32.mrf.mxu0
        %v853 = vadd.f32 %v839, %v852
        %v854 = vpop.f32.mrf.mxu0
        %v855 = vadd.f32 %v841, %v854
        %856 = vdwg.mxu0
        %857 = vmatpush.bf16.msra.mxu0 %v694
        %858 = vmatpush.bf16.msra.mxu0 %v692
        %859 = vmatpush.bf16.msra.mxu0 %v690
        %860 = vmatpush.bf16.msra.mxu0 %v688
        %861 = vmatpush.bf16.msra.mxu0 %v686
        %862 = vmatpush.bf16.msra.mxu0 %v684
        %863 = vmatpush.bf16.msra.mxu0 %v682
        %864 = vmatpush.bf16.msra.mxu0 %v680
        %865 = vmatmul.bf16.gmra.mxu0 %v368
        %v866 = vpop.f32.mrf.mxu0
        %v867 = vadd.f32 %v853, %v866
        %v868 = vpop.f32.mrf.mxu0
        %v869 = vadd.f32 %v855, %v868
        %870 = vdwg.mxu0
        %v871 = vmul.f32 %v811, %v811
        %v872 = vmul.f32 %v867, %v867
        %v873 = vmul.f32 %v813, %v813
        %v874 = vmul.f32 %v869, %v869
        %v875 = vadd.f32 %v871, %v872
        %876 = vadd.xlane.f32.xlu0 %v875
        %v877 = vpop.xlane.xlu0 %876
        %v878 = vadd.f32 %v873, %v874
        %879 = vadd.xlane.f32.xlu0 %v878
        %v880 = vpop.xlane.xlu0 %879
        %v881 = vmax.f32 %v877, 1e-24
        %v882 = vmax.f32 %v880, 1e-24
        %v883 = vrsqrt.pop %v881
        %v884 = vmul.f32 %v883, %v881
        %v885 = vmul.f32 %v884, %v883
        %v886 = vmul.f32 0.5, %v885
        %v887 = vsub.f32 1.5, %v886
        %v888 = vmul.f32 %v883, %v887
        %vm889 = vweird.f32 %v881
        %vm890 = vweird.f32 %v883
        %vm891 = vmor %vm889, %vm890
        %v892 = vsel %vm891, %v883, %v888
        %v893 = vrsqrt.pop %v882
        %v894 = vmul.f32 %v893, %v882
        %v895 = vmul.f32 %v894, %v893
        %v896 = vmul.f32 0.5, %v895
        %v897 = vsub.f32 1.5, %v896
        %v898 = vmul.f32 %v893, %v897
        %vm899 = vweird.f32 %v882
        %vm900 = vweird.f32 %v893
        %vm901 = vmor %vm899, %vm900
        %v902 = vsel %vm901, %v893, %v898
        %v903 = vmul.f32 %v892, 8.5
        %v904 = vmul.f32 %v902, 8.5
        %v905 = vmul.f32 %v811, %v903
        %v906 = vmul.f32 %v867, %v903
        %v907 = vmul.f32 %v813, %v904
        %v908 = vmul.f32 %v869, %v904
        %v909 = vpack.c.bf16 %v907, %v905
        %v910 = vpack.c.bf16 %v908, %v906
        %v911 = vld [vmem:[#allocation8] sm:$0xf]
        %v912 = vld [vmem:[#allocation8 + $0x4] sm:$0xf]
        %v913 = vld [vmem:[#allocation8 + $0x8] sm:$0xf]
        %v914 = vld [vmem:[#allocation8 + $0xc] sm:$0xf]
        %v915 = vld [vmem:[#allocation8 + $0x10] sm:$0xf]
        %v916 = vld [vmem:[#allocation8 + $0x14] sm:$0xf]
        %v917 = vld [vmem:[#allocation8 + $0x18] sm:$0xf]
        %v918 = vld [vmem:[#allocation8 + $0x1c] sm:$0xf]
        %v919 = vld [vmem:[#allocation8 + $0x20] sm:$0xf]
        %v920 = vld [vmem:[#allocation8 + $0x24] sm:$0xf]
        %v921 = vld [vmem:[#allocation8 + $0x28] sm:$0xf]
        %v922 = vld [vmem:[#allocation8 + $0x2c] sm:$0xf]
        %v923 = vld [vmem:[#allocation8 + $0x30] sm:$0xf]
        %v924 = vld [vmem:[#allocation8 + $0x34] sm:$0xf]
        %v925 = vld [vmem:[#allocation8 + $0x38] sm:$0xf]
        %v926 = vld [vmem:[#allocation8 + $0x3c] sm:$0xf]
        %v927 = vld [vmem:[#allocation8 + $0x40] sm:$0xf]
        %v928 = vld [vmem:[#allocation8 + $0x44] sm:$0xf]
        %v929 = vld [vmem:[#allocation8 + $0x48] sm:$0xf]
        %v930 = vld [vmem:[#allocation8 + $0x4c] sm:$0xf]
        %v931 = vld [vmem:[#allocation8 + $0x50] sm:$0xf]
        %v932 = vld [vmem:[#allocation8 + $0x54] sm:$0xf]
        %v933 = vld [vmem:[#allocation8 + $0x58] sm:$0xf]
        %v934 = vld [vmem:[#allocation8 + $0x5c] sm:$0xf]
        %v935 = vld [vmem:[#allocation8 + $0x60] sm:$0xf]
        %v936 = vld [vmem:[#allocation8 + $0x64] sm:$0xf]
        %v937 = vld [vmem:[#allocation8 + $0x68] sm:$0xf]
        %v938 = vld [vmem:[#allocation8 + $0x6c] sm:$0xf]
        %v939 = vld [vmem:[#allocation8 + $0x70] sm:$0xf]
        %v940 = vld [vmem:[#allocation8 + $0x74] sm:$0xf]
        %v941 = vld [vmem:[#allocation8 + $0x78] sm:$0xf]
        %v942 = vld [vmem:[#allocation8 + $0x7c] sm:$0xf]
        %v943 = vld [vmem:[%s4] sm:$0x1]
        %v945 = vperm.slane %v943, 0
        %v979 = vunpack.c.l.b16 %v911
        %v980 = vunpack.c.l.b16 %v912
        %v981 = vunpack.c.l.b16 %v913
        %v982 = vunpack.c.l.b16 %v914
        %v983 = vunpack.c.l.b16 %v915
        %v984 = vunpack.c.l.b16 %v916
        %v985 = vunpack.c.l.b16 %v917
        %v986 = vunpack.c.l.b16 %v918
        %v987 = vunpack.c.l.b16 %v919
        %v988 = vunpack.c.l.b16 %v920
        %v989 = vunpack.c.l.b16 %v921
        %v990 = vunpack.c.l.b16 %v922
        %v991 = vunpack.c.l.b16 %v923
        %v992 = vunpack.c.l.b16 %v924
        %v993 = vunpack.c.l.b16 %v925
        %v994 = vunpack.c.l.b16 %v926
        %v995 = vunpack.c.l.b16 %v927
        %v996 = vunpack.c.l.b16 %v928
        %v997 = vunpack.c.l.b16 %v929
        %v998 = vunpack.c.l.b16 %v930
        %v999 = vunpack.c.l.b16 %v931
        %v1000 = vunpack.c.l.b16 %v932
        %v1001 = vunpack.c.l.b16 %v933
        %v1002 = vunpack.c.l.b16 %v934
        %v1003 = vunpack.c.l.b16 %v935
        %v1004 = vunpack.c.l.b16 %v936
        %v1005 = vunpack.c.l.b16 %v937
        %v1006 = vunpack.c.l.b16 %v938
        %v1007 = vunpack.c.l.b16 %v939
        %v1008 = vunpack.c.l.b16 %v940
        %v1009 = vunpack.c.l.b16 %v941
        %v1010 = vunpack.c.l.b16 %v942
        %v1011 = vpack.c.b16 %v980, %v979
        %v1012 = vpack.c.b16 %v982, %v981
        %v1013 = vpack.c.b16 %v984, %v983
        %v1014 = vpack.c.b16 %v986, %v985
        %v1015 = vpack.c.b16 %v988, %v987
        %v1016 = vpack.c.b16 %v990, %v989
        %v1017 = vpack.c.b16 %v992, %v991
        %v1018 = vpack.c.b16 %v994, %v993
        %v1019 = vpack.c.b16 %v996, %v995
        %v1020 = vpack.c.b16 %v998, %v997
        %v1021 = vpack.c.b16 %v1000, %v999
        %v1022 = vpack.c.b16 %v1002, %v1001
        %v1023 = vpack.c.b16 %v1004, %v1003
        %v1024 = vpack.c.b16 %v1006, %v1005
        %v1025 = vpack.c.b16 %v1008, %v1007
        %v1026 = vpack.c.b16 %v1010, %v1009
        %1043 = vmatpush.bf16.msra.mxu0 %v1018
        %1044 = vmatpush.bf16.msra.mxu0 %v1017
        %1045 = vmatpush.bf16.msra.mxu0 %v1016
        %1046 = vmatpush.bf16.msra.mxu0 %v1015
        %1047 = vmatpush.bf16.msra.mxu0 %v1014
        %1048 = vmatpush.bf16.msra.mxu0 %v1013
        %1049 = vmatpush.bf16.msra.mxu0 %v1012
        %1050 = vmatpush.bf16.msra.mxu0 %v1011
        %1051 = vmatmul.bf16.gmra.mxu0 %v909
        %v1052 = vpop.f32.mrf.mxu0
        %v1053 = vadd.f32 %v945, %v1052
        %v1054 = vpop.f32.mrf.mxu0
        %v1055 = vadd.f32 %v945, %v1054
        %1056 = vdwg.mxu0
        %1057 = vmatpush.bf16.msra.mxu0 %v1026
        %1058 = vmatpush.bf16.msra.mxu0 %v1025
        %1059 = vmatpush.bf16.msra.mxu0 %v1024
        %1060 = vmatpush.bf16.msra.mxu0 %v1023
        %1061 = vmatpush.bf16.msra.mxu0 %v1022
        %1062 = vmatpush.bf16.msra.mxu0 %v1021
        %1063 = vmatpush.bf16.msra.mxu0 %v1020
        %1064 = vmatpush.bf16.msra.mxu0 %v1019
        %1065 = vmatmul.bf16.gmra.mxu0 %v910
        %v1066 = vpop.f32.mrf.mxu0
        %v1067 = vadd.f32 %v1053, %v1066
        %v1068 = vpop.f32.mrf.mxu0
        %v1069 = vadd.f32 %v1055, %v1068
        %1070 = vdwg.mxu0
        %1071 = vst [vmem:[%s332] sm:$0xff] %v905
        %1072 = vst [vmem:[%s332 + $0x8] sm:$0xff] %v906
        %1073 = vst [vmem:[%s332 + $0x10] sm:$0xff] %v907
        %1074 = vst [vmem:[%s332 + $0x18] sm:$0xff] %v908
        %v1075 = vpack.c.bf16 %v1067, %v1067
        %v1076 = vpack.c.bf16 %v1069, %v1069
        %1077 = vst [vmem:[%s339] sm:$0xf] %v1075
        %1078 = vst [vmem:[%s339 + $0x4] sm:$0xf] %v1076
        %s1079 = sand.u32 %s147, 1
        %s1080 = scalar_lea.sflag [#allocation4], %s1079
        %s1081 = sand.u32 %s147, 1
        %s1082 = smul.addr %s1081, 32
        %s1083 = scalar_lea.vmem [#allocation10], %s1082
        %s1084 = sand.u32 %s173, 1
        %s1085 = scalar_lea.sflag [#allocation12], %s1084
        %s1086 = sand.u32 %s173, 1
        %s1087 = smul.addr %s1086, 8
        %s1088 = scalar_lea.vmem [#allocation11], %s1087
        // Predicated region
        $region57: #{tpu_custom_call.1} parent=39 // pred_check
          %p1089 = pneg %p157
        $region58: #{tpu_custom_call.1} parent=39 // pred_check_branch
          %1091 = sbr.rel (%p1089) target = $region60
        $region59: #{tpu_custom_call.1} parent=39 // pred_region
          %s1092 = smul.u32 2, %s29
          %s1093 = ssub.s32 3, %s1092
          %p1094 = scmp.lt.s32.totalorder %s1093, 2
          %s1095 = scalar_select %p1094, %s1093, 2
          %s1096 = smul.u32 8, %s1095
          %s1097 = smul.u32 %s1096, 2
          %s1098 = ssub.s32 32, %s1097
          %s1099 = sshll.u32 %s1098, 4
          %1100 = vsyncadd %s1080, %s1099
          %p1101 = scmp.ne.s32.totalorder 0, %s1097
          %s1102 = smul.addr %s1092, 2
          %s1103 = smul.addr %s1102, 8
          %s1104 = scalar_lea.hbm %s5, %s1103
          %s1105 = smul.u32 16, %s1095
          %s1106 = sshll.u32 %s1083, 4
          %s1107 = int_to_ptr.vmem [resolvable:$true] %s1106
          %s1108 = sshll.u32 %s1104, 4
          %s1109 = int_to_ptr.hbm [resolvable:$true] %s1108
          %s1110 = sshll.u32 %s1105, 4
          %1114 = dma.vmem_to_hbm [thread:$0]  (%p1101), %s1107, %s1110, %s1109, %s1080, 256, 256, 16
        $region60: #{tpu_custom_call.1} parent=39 // pred_fallthru
          _
        // Predicated region
        $region61: #{tpu_custom_call.1} parent=39 // pred_check
          %p1115 = pneg %p183
        $region62: #{tpu_custom_call.1} parent=39 // pred_check_branch
          %1117 = sbr.rel (%p1115) target = $region64
        $region63: #{tpu_custom_call.1} parent=39 // pred_region
          %s1118 = smul.u32 2, %s29
          %s1119 = ssub.s32 3, %s1118
          %p1120 = scmp.lt.s32.totalorder %s1119, 2
          %s1121 = scalar_select %p1120, %s1119, 2
          %s1122 = smul.u32 4, %s1121
          %s1123 = ssub.s32 8, %s1122
          %s1124 = sshll.u32 %s1123, 4
          %1125 = vsyncadd %s1085, %s1124
          %p1126 = scmp.ne.s32.totalorder 0, %s1122
          %s1127 = smul.addr %s1118, 4
          %s1128 = scalar_lea.hbm %s6, %s1127
          %s1129 = smul.u32 4, %s1121
          %s1130 = sshll.u32 %s1088, 4
          %s1131 = int_to_ptr.vmem [resolvable:$true] %s1130
          %s1132 = sshll.u32 %s1128, 4
          %s1133 = int_to_ptr.hbm [resolvable:$true] %s1132
          %s1134 = sshll.u32 %s1129, 4
          %1138 = dma.vmem_to_hbm [thread:$0]  (%p1126), %s1131, %s1134, %s1133, %s1085, 64, 64, 4
        $region64: #{tpu_custom_call.1} parent=39 // pred_fallthru
          _
      $region40: #{tpu_custom_call.1} parent=5 // pred_fallthru
        _
      %p1139 = scmp.le.s32.totalorder 2, %s24
      // Predicated region
      $region65: #{tpu_custom_call.1} parent=5 // pred_check
        %p1140 = pneg %p1139
      $region66: #{tpu_custom_call.1} parent=5 // pred_check_branch
        %1142 = sbr.rel (%p1140) target = $region68
      $region67: #{tpu_custom_call.1} parent=5 // pred_region
        %s1143 = ssub.s32 %s24, 2
        // Predicated region
        $region69: #{tpu_custom_call.1} parent=67 // pred_check
          %p1144 = pneg %p163
        $region70: #{tpu_custom_call.1} parent=67 // pred_check_branch
          %1146 = sbr.rel (%p1144) target = $region72
        $region71: #{tpu_custom_call.1} parent=67 // pred_region
          %s1147 = sand.u32 %s148, 1
          %s1148 = scalar_lea.sflag [#allocation4], %s1147
          %s1149 = sand.u32 %s148, 1
          %s1150 = smul.addr %s1149, 32
          %s1151 = scalar_lea.vmem [#allocation10], %s1150
          %1153 = dma.done %s1148, 512
        $region72: #{tpu_custom_call.1} parent=67 // pred_fallthru
          _
        // Predicated region
        $region73: #{tpu_custom_call.1} parent=67 // pred_check
          %p1154 = pneg %p189
        $region74: #{tpu_custom_call.1} parent=67 // pred_check_branch
          %1156 = sbr.rel (%p1154) target = $region76
        $region75: #{tpu_custom_call.1} parent=67 // pred_region
          %s1157 = sand.u32 %s174, 1
          %s1158 = scalar_lea.sflag [#allocation12], %s1157
          %s1159 = sand.u32 %s174, 1
          %s1160 = smul.addr %s1159, 8
          %s1161 = scalar_lea.vmem [#allocation11], %s1160
          %1163 = dma.done %s1158, 128
        $region76: #{tpu_custom_call.1} parent=67 // pred_fallthru
          _
      $region68: #{tpu_custom_call.1} parent=5 // pred_fallthru
        _
    $region6: #{tpu_custom_call.1} parent=1 // loop_footer
      %s28 = sadd.s32 1, %s24
    $region7: #{tpu_custom_call.1} parent=1 // loop_footer_branch
      %23 = sbr.rel target = $region3
    $region8: #{tpu_custom_call.1} parent=1 // loop_exit
      _
    %1164 = vsyncpa [#allocation3], 1
    %s1165 = scalar_lea.sflag [#allocation3], 1
    %1166 = vsyncpa %s1165, 1
    %1167 = vsyncpa [#allocation6], 1
    %1168 = vsyncpa [#allocation9], 1
    %1169 = vsyncpa [#allocation4], 1
    %s1170 = scalar_lea.sflag [#allocation4], 1
    %1171 = vsyncpa %s1170, 1
    %1172 = vsyncpa [#allocation12], 1
    %s1173 = scalar_lea.sflag [#allocation12], 1
    %1174 = vsyncpa %s1173, 1

</llo_original>
